<compile_context>
chip_gen: v5e
topology: v5e:2x2
jax: 0.10.0
libtpu: 0.0.40
codegen_flags: <defaults>
</compile_context>

<pallas_src>
import math
from functools import partial
from types import SimpleNamespace

import jax
import jax.numpy as jnp
from jax.experimental import pallas as pl
from jax.experimental.pallas import tpu as pltpu


# ------------------------------ helpers ------------------------------------ #

def _round_up(x, m):
    return ((x + m - 1) // m) * m


def _choose_tm(m):
    """Largest M tile (<=512, 16-aligned) that still yields >= 2 M tiles, so the
    v7x megacore can shard the only parallel grid axis across both TensorCores."""
    for tm in (512, 256, 128, 64, 32, 16):
        if m >= 2 * tm:
            return tm
    return m if m % 8 == 0 else _round_up(m, 8)   # tiny M: single tile


# ----------------------------- Pallas kernels ------------------------------- #

def _patch_embed_kernel_f32(x_ref, w_ref, b_ref, o_ref):
    # x: (tm, tk) bf16  w: (tk, N_pad) bf16  b: (1, N_pad) f32  o: (tm, N_pad) f32
    # f32 output: accumulate directly into the resident output block (no scratch).
    @pl.when(pl.program_id(1) == 0)
    def _():
        o_ref[...] = jnp.broadcast_to(b_ref[...], o_ref.shape)

    o_ref[...] += jnp.dot(x_ref[...], w_ref[...],
                          preferred_element_type=jnp.float32)


def _patch_embed_kernel_cast(x_ref, w_ref, b_ref, o_ref, acc_ref):
    # Narrow (e.g. bf16) output: f32 VMEM accumulator, cast once on the last k.
    k = pl.program_id(1)

    @pl.when(k == 0)
    def _():
        acc_ref[...] = jnp.broadcast_to(b_ref[...], acc_ref.shape)

    acc_ref[...] += jnp.dot(x_ref[...], w_ref[...],
                            preferred_element_type=jnp.float32)

    @pl.when(k == pl.num_programs(1) - 1)
    def _():
        o_ref[...] = acc_ref[...].astype(o_ref.dtype)


def patch_embed(x2d, w_pad, b_pad, out_dtype=jnp.float32):
    """(M, K) @ (K_pad, N_pad) + bias -> (M, N_pad) in `out_dtype`.

    w_pad is bf16, zero-padded to 128-multiples; b_pad is f32 (1, N_pad).
    Grid = (M tiles, K tiles); the full hidden dim is produced per tile so the
    activation slab is read from HBM exactly once.
    """
    M, K = x2d.shape
    K_pad, N_pad = w_pad.shape

    x = x2d.astype(jnp.bfloat16)
    if K < K_pad:                      # zero K-padding contributes nothing to dot
        x = jnp.pad(x, ((0, 0), (0, K_pad - K)))

    out_bytes = jnp.dtype(out_dtype).itemsize
    use_scratch = jnp.dtype(out_dtype) != jnp.dtype(jnp.float32)

    def vmem_est(tm_, tk_):
        est = (2 * tm_ * tk_ * 2                 # x blocks (bf16, double buffered)
               + 2 * tk_ * N_pad * 2             # w blocks (bf16, double buffered)
               + 2 * N_pad * 4                   # bias
               + 2 * tm_ * N_pad * out_bytes)    # output blocks
        if use_scratch:
            est += tm_ * N_pad * 4               # f32 accumulator scratch
        return est

    budget = 26 * 1024 * 1024   # < 32 MiB scoped default, well under v7x 64 MiB phys
    tm0 = _choose_tm(M)
    tm_cands = [tm0] + [t for t in (256, 128, 64, 32, 16) if t < tm0]
    tk_cands = [K_pad] + [t for t in (512, 256, 128) if t < K_pad and K_pad % t == 0]

    tm, tk = tm_cands[-1], tk_cands[-1]
    found = False
    for tm_ in tm_cands:              # prefer large M tiles (fewer weight re-reads)
        for tk_ in tk_cands:          # then the largest K tile that fits VMEM
            if vmem_est(tm_, tk_) <= budget:
                tm, tk, found = tm_, tk_, True
                break
        if found:
            break
    # TODO(synk): for very large hidden sizes reintroduce an N grid axis; all
    # common ViT hiddens (<=1536) fit comfortably with tn == N_pad.

    grid = (pl.cdiv(M, tm), K_pad // tk)
    m_tiles = grid[0]

    est = vmem_est(tm, tk)
    vmem_limit = int(min(60 * 1024 * 1024, max(16 * 1024 * 1024, 2 * est)))

    cost = pl.CostEstimate(
        flops=2 * M * K_pad * N_pad,
        transcendentals=0,
        bytes_accessed=(M * K_pad * 2                    # activations read once
                        + m_tiles * K_pad * N_pad * 2    # weight re-read per M tile
                        + N_pad * 4                      # bias
                        + M * N_pad * out_bytes),        # output written once
    )

    if use_scratch:
        kernel = _patch_embed_kernel_cast
        scratch = [pltpu.VMEM((tm, N_pad), jnp.float32)]
    else:
        kernel = _patch_embed_kernel_f32
        scratch = []

    return pl.pallas_call(
        kernel,
        out_shape=jax.ShapeDtypeStruct((M, N_pad), out_dtype),
        grid_spec=pltpu.PrefetchScalarGridSpec(
            num_scalar_prefetch=0,
            grid=grid,
            in_specs=[
                pl.BlockSpec((tm, tk), lambda i, k: (i, k)),
                pl.BlockSpec((tk, N_pad), lambda i, k: (k, 0)),
                pl.BlockSpec((1, N_pad), lambda i, k: (0, 0)),
            ],
            out_specs=pl.BlockSpec((tm, N_pad), lambda i, k: (i, 0)),
            scratch_shapes=scratch,
        ),
        compiler_params=pltpu.CompilerParams(
            dimension_semantics=("parallel", "arbitrary"),
            vmem_limit_bytes=vmem_limit,
        ),
        cost_estimate=cost,
    )(x, w_pad, b_pad)


# --------------------------- jitted forward glue ---------------------------- #

def _extract_patches(images, patch_size):
    """NCHW -> (B, P, C*p*p), equivalent to Conv2d(stride=patch) patchification."""
    B, C, H, W = images.shape
    p = patch_size
    gh, gw = H // p, W // p
    x = images.reshape(B, C, gh, p, gw, p)
    x = jnp.transpose(x, (0, 2, 4, 1, 3, 5))            # (B, gh, gw, C, p, p)
    return x.reshape(B, gh * gw, C * p * p)


@partial(jax.jit, static_argnames=("patch_size", "hidden_size", "out_dtype"))
def _vision_tower_forward(images, w_pad, b_pad, *, patch_size, hidden_size,
                          out_dtype=jnp.float32):
    # TODO(synk): a fully fused variant would read `images` directly in-kernel
    # (index_map over batch / patch-row) and do the im2col reorder in VMEM,
    # avoiding the HBM round-trip of the im2col slab entirely.
    # Cast to bf16 first so XLA fuses the cast into the im2col transpose producer.
    patches = _extract_patches(images.astype(jnp.bfloat16), patch_size)  # (B,P,K)
    B, P, K = patches.shape
    out = patch_embed(patches.reshape(B * P, K), w_pad, b_pad, out_dtype)
    n_pad = out.shape[1]
    out = out.reshape(B, P, n_pad)
    if hidden_size != n_pad:   # common ViT hiddens (1024/1152/1280) skip this slice
        out = out[..., :hidden_size]
    return out


# ------------------------------ module port -------------------------------- #

class BaseVisionTowerPallas:
    """JAX/Pallas port of BaseVisionTower with a minimal concrete _forward."""

    def __init__(self, vision_tower_name, args, delay_load=False):
        self.is_loaded = False
        self.args = args
        self.vision_tower_name = vision_tower_name
        self.select_layer = getattr(args, "mm_vision_select_layer", -1)
        self.select_feature = getattr(args, "mm_vision_select_feature", "patch")
        self.unfreeze_mm_vision_tower = getattr(args, "unfreeze_mm_vision_tower", False)
        self.delay_load = delay_load
        self._interp_size = 729

        # synthetic concrete-tower config (small shapes)
        self._hidden_size = getattr(args, "hidden_size", 32)
        self._image_size = getattr(args, "image_size", 16)
        self._patch_size = getattr(args, "patch_size", 4)
        self._in_channels = getattr(args, "in_channels", 4)
        self._output_dtype = getattr(args, "output_dtype", jnp.float32)

        if not delay_load:
            self.load_model()

    # ---- load_model: deterministic synthetic parameter init ----
    def load_model(self, device_map=None):
        c, p, n = self._in_channels, self._patch_size, self._hidden_size
        k = c * p * p
        kw, kb = jax.random.split(jax.random.PRNGKey(42))
        # canonical f32 parameters (module dtype stays f32, like the PyTorch module)
        self.proj_weight = jax.random.normal(kw, (k, n), jnp.float32) / math.sqrt(k)
        self.proj_bias = jax.random.normal(kb, (1, n), jnp.float32) * 0.01

        # MXU-friendly copies: bf16 weight / f32 bias, zero-padded to 128-multiples
        k_pad, n_pad = _round_up(k, 128), _round_up(n, 128)
        self.proj_weight_padded = (
            jnp.zeros((k_pad, n_pad), jnp.bfloat16)
            .at[:k, :n].set(self.proj_weight.astype(jnp.bfloat16))
        )
        self.proj_bias_padded = (
            jnp.zeros((1, n_pad), jnp.float32).at[:, :n].set(self.proj_bias)
        )
        self.is_loaded = True

    # ---- concrete _forward: patch-embedding projection via Pallas ----
    def _forward(self, images):
        feats = _vision_tower_forward(
            images, self.proj_weight_padded, self.proj_bias_padded,
            patch_size=self._patch_size, hidden_size=self._hidden_size,
            out_dtype=self._output_dtype)
        if self.select_feature == "patch":
            pass  # synthetic tower has no CLS token to drop
        # TODO(synk): subclasses interpolate features to self._interp_size (729)
        # tokens; the base class forward itself performs no interpolation.
        return feats

    # ---- forward: list-vs-tensor dispatch, same semantics as the PyTorch code ----
    def forward(self, images):
        if type(images) is list:
            shapes = {tuple(im.shape) for im in images}
            if len(shapes) == 1:
                # single pallas_call for the whole list, then split (identical to
                # per-image _forward since the projection is per-image independent)
                feats = self._forward(jnp.stack(list(images), axis=0))
                return [feats[i:i + 1] for i in range(feats.shape[0])]
            # heterogeneous shapes: fall back to the original per-image loop
            return [self._forward(image[None, ...]) for image in images]
        return self._forward(images)

    # ---- properties mirrored from the PyTorch module ----
    @property
    def dummy_feature(self):
        return jnp.zeros((1, self.hidden_size), dtype=self.dtype)

    @property
    def dtype(self):
        return self.proj_weight.dtype

    @property
    def hidden_size(self):
        return self._hidden_size

    @property
    def image_size(self):
        return self._image_size

    @property
    def patch_size(self):
        return self._patch_size

    @property
    def num_patches_per_side(self):
        if self._interp_size is not None:
            return int(self._interp_size ** 0.5)
        return self.image_size // self.patch_size

    @property
    def num_patches(self):
        if self._interp_size is not None:
            return self._interp_size
        return self.num_patches_per_side ** 2


# --------------------------------- main ------------------------------------ #

if __name__ == "__main__":
    args = SimpleNamespace(
        mm_vision_select_layer=-1,
        mm_vision_select_feature="patch",
        unfreeze_mm_vision_tower=False,
        hidden_size=32,
        image_size=16,
        patch_size=4,
        in_channels=4,
    )
    tower = BaseVisionTowerPallas("synthetic-vit", args)

    key = jax.random.PRNGKey(0)
    images = jax.random.normal(key, (2, 4, 16, 16), jnp.float32)   # NCHW

    # tensor path (f32 output, accumulate-in-output kernel)
    feats = tower.forward(images)
    feats = jax.block_until_ready(feats)
    assert feats.shape == (2, 16, 32), feats.shape
    assert feats.dtype == jnp.float32, feats.dtype

    # reference check (pure JAX, f32).  Kernel uses bf16 operands with f32
    # accumulation, so tolerances are loosened accordingly.
    patches_f32 = _extract_patches(images, tower.patch_size)
    ref = jnp.einsum("bpk,kn->bpn", patches_f32, tower.proj_weight) + tower.proj_bias
    assert jnp.allclose(feats, ref, atol=2e-2, rtol=2e-2), "mismatch vs reference"

    # bf16-output fast path (halves the output HBM writeback on v5e/v6e)
    feats_bf16 = jax.block_until_ready(_vision_tower_forward(
        images, tower.proj_weight_padded, tower.proj_bias_padded,
        patch_size=tower.patch_size, hidden_size=tower.hidden_size,
        out_dtype=jnp.bfloat16))
    assert feats_bf16.shape == (2, 16, 32), feats_bf16.shape
    assert feats_bf16.dtype == jnp.bfloat16, feats_bf16.dtype
    assert jnp.allclose(feats_bf16.astype(jnp.float32), ref, atol=6e-2, rtol=6e-2), \
        "bf16-output mismatch vs reference"

    # list path (mirrors `images.unsqueeze(0)` per image; batched into one call)
    feats_list = tower.forward([images[0], images[1]])
    feats_list = [jax.block_until_ready(f) for f in feats_list]
    assert all(f.shape == (1, 16, 32) for f in feats_list)
    assert jnp.allclose(jnp.concatenate(feats_list, axis=0), feats, atol=1e-6)

    print("KERNEL_OK")
</pallas_src>

<mosaic_0001>
module attributes {stable_mosaic.version = 11 : i64} {
  func.func @_patch_embed_kernel_f32(%arg0: i32, %arg1: i32, %arg2: memref<16x128xbf16, #tpu.memory_space<vmem>>, %arg3: memref<128x128xbf16, #tpu.memory_space<vmem>>, %arg4: memref<1x128xf32, #tpu.memory_space<vmem>>, %arg5: memref<16x128xf32, #tpu.memory_space<vmem>>) attributes {dimension_semantics = [#tpu.dimension_semantics<parallel>, #tpu.dimension_semantics<arbitrary>], iteration_bounds = array<i64: 2, 1>, scalar_prefetch = 0 : i64, scratch_operands = 0 : i64, tpu.core_type = #tpu.core_type<tc>, window_params = [{transform_indices = @transform_0, window_bounds = array<i64: 16, 128>}, {transform_indices = @transform_1, window_bounds = array<i64: 128, 128>}, {pipeline_mode = #tpu.pipeline_mode<synchronous>, transform_indices = @transform_2, window_bounds = array<i64: 1, 128>}, {transform_indices = @transform_3, window_bounds = array<i64: 16, 128>}]} {
    %c0_i32 = arith.constant 0 : i32
    %0 = arith.cmpi eq, %arg1, %c0_i32 : i32
    %1 = arith.extui %0 : i1 to i32
    %c0_i32_0 = arith.constant 0 : i32
    %2 = arith.cmpi ne, %1, %c0_i32_0 : i32
    scf.if %2 {
      %c0_8 = arith.constant 0 : index
      %c0_9 = arith.constant 0 : index
      %9 = vector.load %arg4[%c0_8, %c0_9] : memref<1x128xf32, #tpu.memory_space<vmem>>, vector<1x128xf32>
      %10 = vector.shape_cast %9 : vector<1x128xf32> to vector<1x128xf32>
      %11 = vector.broadcast %10 : vector<1x128xf32> to vector<16x128xf32>
      %c0_10 = arith.constant 0 : index
      %c0_11 = arith.constant 0 : index
      %12 = vector.load %arg5[%c0_10, %c0_11] : memref<16x128xf32, #tpu.memory_space<vmem>>, vector<16x128xf32>
      tpu.vector_store %arg5[%c0_10, %c0_11], %11 {strides = array<i32>} : memref<16x128xf32, #tpu.memory_space<vmem>>, vector<16x128xf32>,
    } else {
    }
    %c0 = arith.constant 0 : index
    %c0_1 = arith.constant 0 : index
    %3 = vector.load %arg5[%c0, %c0_1] : memref<16x128xf32, #tpu.memory_space<vmem>>, vector<16x128xf32>
    %c0_2 = arith.constant 0 : index
    %c0_3 = arith.constant 0 : index
    %4 = vector.load %arg2[%c0_2, %c0_3] : memref<16x128xbf16, #tpu.memory_space<vmem>>, vector<16x128xbf16>
    %c0_4 = arith.constant 0 : index
    %c0_5 = arith.constant 0 : index
    %5 = vector.load %arg3[%c0_4, %c0_5] : memref<128x128xbf16, #tpu.memory_space<vmem>>, vector<128x128xbf16>
    %cst = arith.constant dense<0.000000e+00> : vector<16x128xf32>
    %6 = tpu.matmul %4, %5, %cst {dimension_numbers = #tpu.dot_dimension_numbers<[1], [0], [0], [1], [0, 0, 1, 1], [], []>} : vector<16x128xbf16>, vector<128x128xbf16>, vector<16x128xf32> -> vector<16x128xf32>
    %7 = arith.addf %3, %6 : vector<16x128xf32>
    %c0_6 = arith.constant 0 : index
    %c0_7 = arith.constant 0 : index
    %8 = vector.load %arg5[%c0_6, %c0_7] : memref<16x128xf32, #tpu.memory_space<vmem>>, vector<16x128xf32>
    tpu.vector_store %arg5[%c0_6, %c0_7], %7 {strides = array<i32>} : memref<16x128xf32, #tpu.memory_space<vmem>>, vector<16x128xf32>,
    return
  }
  func.func @transform_0(%arg0: i32, %arg1: i32) -> (i32, i32) {
    %c0_i32 = arith.constant 0 : i32
    return %arg0, %arg1 : i32, i32
  }
  func.func @transform_1(%arg0: i32, %arg1: i32) -> (i32, i32) {
    %c0_i32 = arith.constant 0 : i32
    %c0_i32_0 = arith.constant 0 : i32
    return %arg1, %c0_i32 : i32, i32
  }
  func.func @transform_2(%arg0: i32, %arg1: i32) -> (i32, i32) {
    %c0_i32 = arith.constant 0 : i32
    %c0_i32_0 = arith.constant 0 : i32
    %c0_i32_1 = arith.constant 0 : i32
    return %c0_i32, %c0_i32_0 : i32, i32
  }
  func.func @transform_3(%arg0: i32, %arg1: i32) -> (i32, i32) {
    %c0_i32 = arith.constant 0 : i32
    %c0_i32_0 = arith.constant 0 : i32
    return %arg0, %c0_i32 : i32, i32
  }
}

</mosaic_0001>

<llo_original>
// kernel: _vision_tower_forward.1
$region0: #{_vision_tower_forward.1}
  #allocation0 [shape = 'u32[]', space=smem, size = 0x4, offset = 0x4, fixed_abs, tag = 'smem constant byte address 0x4 - core index']
  #allocation1 [shape = 'u32[72,128]{1,0:T(1,128)}', space=vmem, size = 0x9000, scoped, tag = 'internal scratch']
  %s0 = inlined_call_operand.vmem [shape: bf16[32,128], index: 0, kind: input, shape index: {}]
  %s1 = inlined_call_operand.vmem [shape: bf16[128,128], index: 1, kind: input, shape index: {}]
  %s2 = inlined_call_operand.vmem [shape: f32[1,128], index: 2, kind: input, shape index: {}]
  %s3 = inlined_call_operand.hbm [shape: f32[32,128], index: 3, kind: output, shape index: {}]
  %s4 = sld [smem:[#allocation0]]
  $region49: #{_vision_tower_forward.1} parent=0
    _
  %s6 = ssub.s32 1, %s4
  %s7 = scalar_select 0, %s6, %s4
  $region1: #{_vision_tower_forward.1} parent=0
    #allocation2 [shape = 'u8[16384]{0}', space=vmem, size = 0x4000, scoped, tag = 'output window, operand 0']
    #allocation3 [shape = 's32[2]{0}', space=sflag, size = 0x8, scoped, tag = 'scoped memory for _vision_tower_forward.1']
    %8 = vsyncpa [#allocation3], 0
    %s9 = scalar_lea.sflag [#allocation3], 1
    %10 = vsyncpa %s9, 0
    loop: start=0, step=1, limit=4
    $region2: #{_vision_tower_forward.1} parent=1 // loop_pre_header
      _
    $region3: #{_vision_tower_forward.1} parent=1 // loop_header
      %s12 = sphi 0, %s16
      %p13 = scmp.ge.s32.totalorder %s12, 4
      %s19 = sphi 0, %s31
      %s20 = sphi 0, %s27
      %s21 = sphi 0, %s19
      %s22 = sphi 0, %s20
      %s23 = sphi 0, %s21
      %s24 = sphi 0, %s22
      %s36 = sphi 0, %s38
      %s39 = sphi 0, %s36
      %s40 = sphi 0, %s39
      %s56 = sphi 0, %s40
      %s62 = sphi 0, %s64
      %s65 = sphi 0, %s62
      %s66 = sphi 0, %s65
      %s82 = sphi 0, %s66
      %s86 = sphi 0, %s86
      %s88 = sphi 0, %s86
      %s89 = sphi 0, %s88
      %s103 = sphi 0, %s89
      %s109 = sphi 0, %s111
      %s112 = sphi 0, %s109
      %s113 = sphi 0, %s112
      %s129 = sphi 0, %s113
    $region4: #{_vision_tower_forward.1} parent=1 // loop_header_branch
      %15 = sbr.rel (%p13) target = $region8
    $region5: #{_vision_tower_forward.1} parent=1 // loop_body
      %s17 = ssub.s32 %s12, 1
      %s18 = ssub.s32 %s12, 2
      %s25 = sadd.s32 1, %s20
      %p26 = scmp.ge.s32.totalorder %s25, 1
      %s27 = scalar_select %p26, 0, %s25
      %s28 = sadd.s32 1, %s19
      %s29 = scalar_select %p26, %s28, %s19
      %p30 = scmp.ge.s32.totalorder %s29, 2
      %s31 = scalar_select %p30, 0, %s29
      %s32 = ssub.s32 %s19, %s31
      %s33 = ssub.s32 %s20, %s27
      %s34 = sor.u32 %s32, %s33
      %p35 = scmp.eq.s32.totalorder %s34, 0
      %s37 = sadd.s32 %s36, 1
      %s38 = scalar_select %p35, %s36, %s37
      %p41 = pneg %p35
      %p42 = scmp.eq.s32.totalorder %s12, 1
      %p43 = por %p41, %p42
      %p44 = scmp.ne.s32.totalorder %s36, %s39
      %p45 = scmp.eq.s32.totalorder %s12, 0
      %p46 = por %p44, %p45
      %p47 = scmp.ne.s32.totalorder %s36, %s39
      %p48 = scmp.eq.s32.totalorder %s17, 1
      %p49 = por %p47, %p48
      %p50 = scmp.ne.s32.totalorder %s39, %s40
      %p51 = scmp.eq.s32.totalorder %s17, 0
      %p52 = por %p50, %p51
      %p53 = scmp.ne.s32.totalorder %s39, %s40
      %p54 = scmp.eq.s32.totalorder %s18, 1
      %p55 = por %p53, %p54
      %p57 = scmp.ne.s32.totalorder %s40, %s56
      %p58 = scmp.eq.s32.totalorder %s18, 0
      %p59 = por %p57, %p58
      %s60 = ssub.s32 %s20, %s27
      %p61 = scmp.eq.s32.totalorder %s60, 0
      %s63 = sadd.s32 %s62, 1
      %s64 = scalar_select %p61, %s62, %s63
      %p67 = pneg %p61
      %p68 = scmp.eq.s32.totalorder %s12, 1
      %p69 = por %p67, %p68
      %p70 = scmp.ne.s32.totalorder %s62, %s65
      %p71 = scmp.eq.s32.totalorder %s12, 0
      %p72 = por %p70, %p71
      %p73 = scmp.ne.s32.totalorder %s62, %s65
      %p74 = scmp.eq.s32.totalorder %s17, 1
      %p75 = por %p73, %p74
      %p76 = scmp.ne.s32.totalorder %s65, %s66
      %p77 = scmp.eq.s32.totalorder %s17, 0
      %p78 = por %p76, %p77
      %p79 = scmp.ne.s32.totalorder %s65, %s66
      %p80 = scmp.eq.s32.totalorder %s18, 1
      %p81 = por %p79, %p80
      %p83 = scmp.ne.s32.totalorder %s66, %s82
      %p84 = scmp.eq.s32.totalorder %s18, 0
      %p85 = por %p83, %p84
      %s87 = sadd.s32 %s86, 1
      %p90 = scmp.eq.s32.totalorder %s12, 1
      %p91 = scmp.ne.s32.totalorder %s86, %s88
      %p92 = scmp.eq.s32.totalorder %s12, 0
      %p93 = por %p91, %p92
      %p94 = scmp.ne.s32.totalorder %s86, %s88
      %p95 = scmp.eq.s32.totalorder %s17, 1
      %p96 = por %p94, %p95
      %p97 = scmp.ne.s32.totalorder %s88, %s89
      %p98 = scmp.eq.s32.totalorder %s17, 0
      %p99 = por %p97, %p98
      %p100 = scmp.ne.s32.totalorder %s88, %s89
      %p101 = scmp.eq.s32.totalorder %s18, 1
      %p102 = por %p100, %p101
      %p104 = scmp.ne.s32.totalorder %s89, %s103
      %p105 = scmp.eq.s32.totalorder %s18, 0
      %p106 = por %p104, %p105
      %s107 = ssub.s32 %s19, %s31
      %p108 = scmp.eq.s32.totalorder %s107, 0
      %s110 = sadd.s32 %s109, 1
      %s111 = scalar_select %p108, %s109, %s110
      %p114 = pneg %p108
      %p115 = scmp.eq.s32.totalorder %s12, 1
      %p116 = por %p114, %p115
      %p117 = scmp.ne.s32.totalorder %s109, %s112
      %p118 = scmp.eq.s32.totalorder %s12, 0
      %p119 = por %p117, %p118
      %p120 = scmp.ne.s32.totalorder %s109, %s112
      %p121 = scmp.eq.s32.totalorder %s17, 1
      %p122 = por %p120, %p121
      %p123 = scmp.ne.s32.totalorder %s112, %s113
      %p124 = scmp.eq.s32.totalorder %s17, 0
      %p125 = por %p123, %p124
      %p126 = scmp.ne.s32.totalorder %s112, %s113
      %p127 = scmp.eq.s32.totalorder %s18, 1
      %p128 = por %p126, %p127
      %p130 = scmp.ne.s32.totalorder %s113, %s129
      %p131 = scmp.eq.s32.totalorder %s18, 0
      %p132 = por %p130, %p131
      %p133 = scmp.le.s32.totalorder 1, %s12
      %p134 = scmp.lt.s32.totalorder %s12, 3
      %p135 = pnand %p133, %p134
      %p136 = pneg %p135
      // Predicated region
      $region9: #{_vision_tower_forward.1} parent=5 // pred_check
        _
      $region10: #{_vision_tower_forward.1} parent=5 // pred_check_branch
        %138 = sbr.rel (%p135) target = $region12
      $region11: #{_vision_tower_forward.1} parent=5 // pred_region
        %s139 = ssub.s32 %s12, 1
        // Predicated region
        $region13: #{_vision_tower_forward.1} parent=11 // pred_check
          %p140 = pneg %p78
        $region14: #{_vision_tower_forward.1} parent=11 // pred_check_branch
          %142 = sbr.rel (%p140) target = $region16
        $region15: #{_vision_tower_forward.1} parent=11 // pred_region
          %s143 = smul.u32 16, %s22
          %p144 = scmp.lt.s32.totalorder %s143, 15
          %s145 = scalar_select %p144, %s143, 15
          %s146 = smul.addr %s145, 4
          %s147 = scalar_lea.vmem %s1, %s146
          %s148 = smul.u32 16, %s22
        $region16: #{_vision_tower_forward.1} parent=11 // pred_fallthru
          _
        // Predicated region
        $region17: #{_vision_tower_forward.1} parent=11 // pred_check
          %p149 = pneg %p99
        $region18: #{_vision_tower_forward.1} parent=11 // pred_check_branch
          %151 = sbr.rel (%p149) target = $region20
        $region19: #{_vision_tower_forward.1} parent=11 // pred_region
          _
        $region20: #{_vision_tower_forward.1} parent=11 // pred_fallthru
          _
      $region12: #{_vision_tower_forward.1} parent=5 // pred_fallthru
        _
      %p152 = scmp.lt.s32.totalorder %s12, 2
      // Predicated region
      $region21: #{_vision_tower_forward.1} parent=5 // pred_check
        %p153 = pneg %p152
      $region22: #{_vision_tower_forward.1} parent=5 // pred_check_branch
        %155 = sbr.rel (%p153) target = $region24
      $region23: #{_vision_tower_forward.1} parent=5 // pred_region
        // Predicated region
        $region25: #{_vision_tower_forward.1} parent=23 // pred_check
          %p156 = pneg %p46
        $region26: #{_vision_tower_forward.1} parent=23 // pred_check_branch
          %158 = sbr.rel (%p156) target = $region28
        $region27: #{_vision_tower_forward.1} parent=23 // pred_region
          %s159 = smul.u32 2, %s19
          %p160 = scmp.lt.s32.totalorder %s159, 3
          %s161 = scalar_select %p160, %s159, 3
          %p162 = scmp.lt.s32.totalorder %s20, 0
          %s163 = scalar_select %p162, %s20, 0
          %s164 = sadd.s32 %s163, %s161
          %s165 = smul.addr %s164, 4
          %s166 = scalar_lea.vmem %s0, %s165
          %s167 = smul.u32 2, %s19
        $region28: #{_vision_tower_forward.1} parent=23 // pred_fallthru
          _
      $region24: #{_vision_tower_forward.1} parent=5 // pred_fallthru
        _
      %p168 = scmp.le.s32.totalorder 1, %s12
      %p169 = scmp.lt.s32.totalorder %s12, 3
      %p170 = pnand %p168, %p169
      %p171 = pneg %p170
      // Predicated region
      $region29: #{_vision_tower_forward.1} parent=5 // pred_check
        _
      $region30: #{_vision_tower_forward.1} parent=5 // pred_check_branch
        %173 = sbr.rel (%p170) target = $region32
      $region31: #{_vision_tower_forward.1} parent=5 // pred_region
        %s174 = ssub.s32 %s12, 1
        %s175 = smul.u32 2, %s21
        %p176 = scmp.lt.s32.totalorder %s175, 3
        %s177 = scalar_select %p176, %s175, 3
        %p178 = scmp.lt.s32.totalorder %s22, 0
        %s179 = scalar_select %p178, %s22, 0
        %s180 = sadd.s32 %s179, %s177
        %s181 = smul.addr %s180, 4
        %s182 = scalar_lea.vmem %s0, %s181
        %p183 = pneg %p52
        %p184 = pneg %p49
        %s185 = smul.u32 16, %s22
        %p186 = scmp.lt.s32.totalorder %s185, 15
        %s187 = scalar_select %p186, %s185, 15
        %s188 = smul.addr %s187, 4
        %s189 = scalar_lea.vmem %s1, %s188
        %p190 = pneg %p78
        %p191 = pneg %p75
        %p192 = pneg %p99
        %p193 = pneg %p96
        %p194 = pneg %p125
        %p195 = pneg %p122
        %s196 = sand.u32 %s112, 1
        %s197 = scalar_lea.sflag [#allocation3], %s196
        %s198 = sand.u32 %s112, 1
        %s199 = smul.addr %s198, 16
        %s200 = scalar_lea.vmem [#allocation2], %s199
        %s201 = smul.u32 2, %s21
        %p202 = scmp.lt.s32.totalorder %s201, 3
        %s203 = scalar_select %p202, %s201, 3
        %p204 = scmp.lt.s32.totalorder %s22, 0
        %s205 = scalar_select %p204, %s22, 0
        %s206 = sadd.s32 %s205, %s203
        %s207 = smul.addr %s206, 4
        %s208 = scalar_lea.vmem %s0, %s207
        %s209 = smul.u32 2, %s21
        %s210 = smul.u32 16, %s22
        %p211 = scmp.lt.s32.totalorder %s210, 15
        %s212 = scalar_select %p211, %s210, 15
        %s213 = smul.addr %s212, 4
        %s214 = scalar_lea.vmem %s1, %s213
        %s215 = smul.u32 16, %s22
        %s216 = smul.u32 2, %s21
        %p217 = scmp.eq.s32.totalorder %s22, 0
        // Predicated region
        $region33: #{_vision_tower_forward.1} parent=31 // pred_check
          %p218 = pneg %p217
        $region34: #{_vision_tower_forward.1} parent=31 // pred_check_branch
          %220 = sbr.rel (%p218) target = $region36
        $region35: #{_vision_tower_forward.1} parent=31 // pred_region
          %v221 = vld [vmem:[%s2] sm:$0x1]
          %v223 = vperm.slane %v221, 0
          %225 = vst [vmem:[%s200] sm:$0xff] %v223
          %226 = vst [vmem:[%s200 + $0x8] sm:$0xff] %v223
        $region36: #{_vision_tower_forward.1} parent=31 // pred_fallthru
          _
        %v227 = vld [vmem:[%s200] sm:$0xff]
        %v228 = vld [vmem:[%s200 + $0x8] sm:$0xff]
        %v229 = vld [vmem:[%s208] sm:$0xf]
        %v230 = vld [vmem:[%s208 + $0x4] sm:$0xf]
        %v231 = vld [vmem:[%s214] sm:$0xf]
        %v232 = vld [vmem:[%s214 + $0x4] sm:$0xf]
        %v233 = vld [vmem:[%s214 + $0x8] sm:$0xf]
        %v234 = vld [vmem:[%s214 + $0xc] sm:$0xf]
        %v235 = vld [vmem:[%s214 + $0x10] sm:$0xf]
        %v236 = vld [vmem:[%s214 + $0x14] sm:$0xf]
        %v237 = vld [vmem:[%s214 + $0x18] sm:$0xf]
        %v238 = vld [vmem:[%s214 + $0x1c] sm:$0xf]
        %v239 = vld [vmem:[%s214 + $0x20] sm:$0xf]
        %v240 = vld [vmem:[%s214 + $0x24] sm:$0xf]
        %v241 = vld [vmem:[%s214 + $0x28] sm:$0xf]
        %v242 = vld [vmem:[%s214 + $0x2c] sm:$0xf]
        %v243 = vld [vmem:[%s214 + $0x30] sm:$0xf]
        %v244 = vld [vmem:[%s214 + $0x34] sm:$0xf]
        %v245 = vld [vmem:[%s214 + $0x38] sm:$0xf]
        %v246 = vld [vmem:[%s214 + $0x3c] sm:$0xf]
        %v249 = vunpack.c.l.b16 %v229
        %v250 = vunpack.c.l.b16 %v230
        %v251 = vpack.c.b16 %v250, %v249
        %v269 = vunpack.c.l.b16 %v231
        %v270 = vunpack.c.l.b16 %v232
        %v271 = vunpack.c.l.b16 %v233
        %v272 = vunpack.c.l.b16 %v234
        %v273 = vunpack.c.l.b16 %v235
        %v274 = vunpack.c.l.b16 %v236
        %v275 = vunpack.c.l.b16 %v237
        %v276 = vunpack.c.l.b16 %v238
        %v277 = vunpack.c.l.b16 %v239
        %v278 = vunpack.c.l.b16 %v240
        %v279 = vunpack.c.l.b16 %v241
        %v280 = vunpack.c.l.b16 %v242
        %v281 = vunpack.c.l.b16 %v243
        %v282 = vunpack.c.l.b16 %v244
        %v283 = vunpack.c.l.b16 %v245
        %v284 = vunpack.c.l.b16 %v246
        %v285 = vpack.c.b16 %v270, %v269
        %v286 = vpack.c.b16 %v272, %v271
        %v287 = vpack.c.b16 %v274, %v273
        %v288 = vpack.c.b16 %v276, %v275
        %v289 = vpack.c.b16 %v278, %v277
        %v290 = vpack.c.b16 %v280, %v279
        %v291 = vpack.c.b16 %v282, %v281
        %v292 = vpack.c.b16 %v284, %v283
        %301 = vmatpush.bf16.msra.mxu0 %v292
        %302 = vmatpush.bf16.msra.mxu0 %v291
        %303 = vmatpush.bf16.msra.mxu0 %v290
        %304 = vmatpush.bf16.msra.mxu0 %v289
        %305 = vmatpush.bf16.msra.mxu0 %v288
        %306 = vmatpush.bf16.msra.mxu0 %v287
        %307 = vmatpush.bf16.msra.mxu0 %v286
        %308 = vmatpush.bf16.msra.mxu0 %v285
        %309 = vmatmul.bf16.gmra.mxu0 %v251
        %v310 = vpop.f32.mrf.mxu0
        %v311 = vadd.f32 0.0, %v310
        %v312 = vpop.f32.mrf.mxu0
        %v313 = vadd.f32 0.0, %v312
        %314 = vdwg.mxu0
        %v315 = vadd.f32 %v227, %v311
        %v316 = vadd.f32 %v228, %v313
        %317 = vst [vmem:[%s200] sm:$0xff] %v315
        %318 = vst [vmem:[%s200 + $0x8] sm:$0xff] %v316
        %s319 = sand.u32 %s112, 1
        %s320 = scalar_lea.sflag [#allocation3], %s319
        %s321 = sand.u32 %s112, 1
        %s322 = smul.addr %s321, 16
        %s323 = scalar_lea.vmem [#allocation2], %s322
        // Predicated region
        $region37: #{_vision_tower_forward.1} parent=31 // pred_check
          %p324 = pneg %p122
        $region38: #{_vision_tower_forward.1} parent=31 // pred_check_branch
          %326 = sbr.rel (%p324) target = $region40
        $region39: #{_vision_tower_forward.1} parent=31 // pred_region
          %s327 = smul.u32 2, %s21
          %329 = vsyncadd %s320, 0
          %s330 = smul.addr %s327, 8
          %s331 = scalar_lea.hbm %s3, %s330
          %s332 = sshll.u32 %s323, 4
          %s333 = int_to_ptr.vmem [resolvable:$true] %s332
          %s334 = sshll.u32 %s331, 4
          %s335 = int_to_ptr.hbm [resolvable:$true] %s334
          %340 = dma.vmem_to_hbm [thread:$0]  %s333, 256, %s335, %s320, 128, 128, 8
        $region40: #{_vision_tower_forward.1} parent=31 // pred_fallthru
          _
      $region32: #{_vision_tower_forward.1} parent=5 // pred_fallthru
        _
      %p341 = scmp.le.s32.totalorder 2, %s12
      // Predicated region
      $region41: #{_vision_tower_forward.1} parent=5 // pred_check
        %p342 = pneg %p341
      $region42: #{_vision_tower_forward.1} parent=5 // pred_check_branch
        %344 = sbr.rel (%p342) target = $region44
      $region43: #{_vision_tower_forward.1} parent=5 // pred_region
        %s345 = ssub.s32 %s12, 2
        // Predicated region
        $region45: #{_vision_tower_forward.1} parent=43 // pred_check
          %p346 = pneg %p128
        $region46: #{_vision_tower_forward.1} parent=43 // pred_check_branch
          %348 = sbr.rel (%p346) target = $region48
        $region47: #{_vision_tower_forward.1} parent=43 // pred_region
          %s349 = sand.u32 %s113, 1
          %s350 = scalar_lea.sflag [#allocation3], %s349
          %s351 = sand.u32 %s113, 1
          %s352 = smul.addr %s351, 16
          %s353 = scalar_lea.vmem [#allocation2], %s352
          %355 = dma.done %s350, 256
        $region48: #{_vision_tower_forward.1} parent=43 // pred_fallthru
          _
      $region44: #{_vision_tower_forward.1} parent=5 // pred_fallthru
        _
    $region6: #{_vision_tower_forward.1} parent=1 // loop_footer
      %s16 = sadd.s32 1, %s12
    $region7: #{_vision_tower_forward.1} parent=1 // loop_footer_branch
      %11 = sbr.rel target = $region3
    $region8: #{_vision_tower_forward.1} parent=1 // loop_exit
      _
    %356 = vsyncpa [#allocation3], 1
    %s357 = scalar_lea.sflag [#allocation3], 1
    %358 = vsyncpa %s357, 1

</llo_original>
